<compile_context>
chip_gen: v7x
topology: tpu7x:2x2x1
jax: 0.10.0
libtpu: 0.0.40
codegen_flags: <defaults>
</compile_context>

<pallas_src>
import jax
import jax.numpy as jnp
import numpy as np
from jax.experimental import pallas as pl
from jax.experimental.pallas import tpu as pltpu


def _round_up(a: int, m: int) -> int:
    return (a + m - 1) // m * m


def local_op_kernel(x_ref, w_ref, shift_ref, o_ref):
    # x_ref:     (S, D, TG)  input tile, group axis lane-dense
    # w_ref:     (C, D)      BN-scale-folded 1x1-conv weight
    # shift_ref: (C, 1)      folded BN shift
    # o_ref:     (C, TG)     relu(max_s conv(x)[s] + shift), lane-dense
    s_total = x_ref.shape[0]
    w = w_ref[...]
    acc = jnp.dot(w, x_ref[0], preferred_element_type=jnp.float32)      # (C, TG)
    for si in range(1, s_total):
        acc = jnp.maximum(
            acc, jnp.dot(w, x_ref[si], preferred_element_type=jnp.float32))
    o_ref[...] = jnp.maximum(acc + shift_ref[...], 0.0).astype(o_ref.dtype)


def local_op(x, w, gamma, beta, running_mean, running_var, eps=1e-5,
             tile_g=None):
    """x: (b, n, s, d) float32, w: (C, d, 1) Conv1d weight. Returns (b, C, n)."""
    b, n, s, d = x.shape
    c = w.shape[0]
    G = b * n

    # ---- fold BN (inference) into the weight / a per-channel shift ----
    scale = (gamma / jnp.sqrt(running_var + eps)).astype(jnp.float32)        # (C,)
    w_scaled = w.reshape(c, d).astype(jnp.float32) * scale[:, None]          # (C, D)
    shift = (beta - running_mean * scale).reshape(c, 1).astype(jnp.float32)  # (C, 1)

    # ---- choose the group tile: big, multiple of 128, VMEM-safe ----
    if tile_g is None:
        tile_g = min(2048, _round_up(G, 128))
        # keep >= 2 grid steps when there is enough work (v7x has 2 TensorCores)
        if G > 128 and _round_up(G, tile_g) // tile_g < 2:
            tile_g = max(128, _round_up(tile_g // 2, 128))
        # VMEM cap: ~2 buffers * (input + output) bytes per group column
        bytes_per_g = (s * d + c) * 4 * 2
        cap = max(128, (8 * 1024 * 1024 // bytes_per_g) // 128 * 128)
        tile_g = min(tile_g, cap)
    assert tile_g % 128 == 0

    G_pad = _round_up(G, tile_g)

    # ---- lane-dense relayout: (b, n, s, d) -> (S, D, G_pad) ----
    X = x.reshape(G, s, d).astype(jnp.float32).transpose(1, 2, 0)   # (S, D, G)
    if G_pad != G:
        X = jnp.pad(X, ((0, 0), (0, 0), (0, G_pad - G)))

    out = pl.pallas_call(
        local_op_kernel,
        out_shape=jax.ShapeDtypeStruct((c, G_pad), jnp.float32),
        grid_spec=pltpu.PrefetchScalarGridSpec(
            num_scalar_prefetch=0,
            grid=(G_pad // tile_g,),
            in_specs=[
                pl.BlockSpec((s, d, tile_g), lambda i: (0, 0, i)),
                pl.BlockSpec((c, d), lambda i: (0, 0)),
                pl.BlockSpec((c, 1), lambda i: (0, 0)),
            ],
            out_specs=pl.BlockSpec((c, tile_g), lambda i: (0, i)),
        ),
        compiler_params=pltpu.CompilerParams(
            dimension_semantics=("parallel",)),
    )(X, w_scaled, shift)

    # (C, G_pad) -> (C, G) -> (b, C, n)   (matches torch view/reshape/permute)
    return out[:, :G].reshape(c, b, n).transpose(1, 0, 2)


def local_op_reference(x, w, gamma, beta, running_mean, running_var, eps=1e-5):
    b, n, s, d = x.shape
    c = w.shape[0]
    X = x.reshape(b * n, s, d).astype(jnp.float32)
    y = jnp.einsum("gsd,cd->gsc", X, w.reshape(c, d).astype(jnp.float32))
    scale = gamma / jnp.sqrt(running_var + eps)
    y = y * scale[None, None, :] + (beta - running_mean * scale)[None, None, :]
    y = jax.nn.relu(y)
    y = jnp.max(y, axis=1)                       # (G, C)
    return y.reshape(b, n, c).transpose(0, 2, 1)


if __name__ == "__main__":
    # Small shapes consistent with the module's forward:
    #   b=2 batches, n=128 local neighborhoods, s=8 points per group,
    #   d=16 input channels, out_channels=32.   (G = b*n = 256 -> grid of 2)
    b, n, s, d = 2, 128, 8, 16
    out_channels = 32

    key = jax.random.PRNGKey(0)
    kx, kw, kg, kb, km, kv = jax.random.split(key, 6)

    x = jax.random.normal(kx, (b, n, s, d), dtype=jnp.float32)

    # Deterministic synthetic parameters (shapes follow the PyTorch module).
    w = 0.1 * jax.random.normal(kw, (out_channels, d, 1), dtype=jnp.float32)
    gamma = 1.0 + 0.1 * jax.random.normal(kg, (out_channels,), dtype=jnp.float32)
    beta = 0.1 * jax.random.normal(kb, (out_channels,), dtype=jnp.float32)
    running_mean = 0.1 * jax.random.normal(km, (out_channels,), dtype=jnp.float32)
    running_var = jnp.abs(
        1.0 + 0.1 * jax.random.normal(kv, (out_channels,), dtype=jnp.float32))

    out = local_op(x, w, gamma, beta, running_mean, running_var)
    out = jax.block_until_ready(out)

    ref = local_op_reference(x, w, gamma, beta, running_mean, running_var)
    assert out.shape == (b, out_channels, n), out.shape
    np.testing.assert_allclose(np.asarray(out), np.asarray(ref),
                               rtol=1e-4, atol=1e-5)

    print("KERNEL_OK")
</pallas_src>

<mosaic_0001>
module attributes {stable_mosaic.version = 11 : i64} {
  func.func @local_op_kernel(%arg0: i32, %arg1: memref<8x16x128xf32, #tpu.memory_space<vmem>>, %arg2: memref<32x16xf32, #tpu.memory_space<vmem>>, %arg3: memref<32x1xf32, #tpu.memory_space<vmem>>, %arg4: memref<32x128xf32, #tpu.memory_space<vmem>>) attributes {dimension_semantics = [#tpu.dimension_semantics<parallel>], iteration_bounds = array<i64: 2>, scalar_prefetch = 0 : i64, scratch_operands = 0 : i64, tpu.core_type = #tpu.core_type<tc>, window_params = [{transform_indices = @transform_0, window_bounds = array<i64: 8, 16, 128>}, {pipeline_mode = #tpu.pipeline_mode<synchronous>, transform_indices = @transform_1, window_bounds = array<i64: 32, 16>}, {pipeline_mode = #tpu.pipeline_mode<synchronous>, transform_indices = @transform_2, window_bounds = array<i64: 32, 1>}, {transform_indices = @transform_3, window_bounds = array<i64: 32, 128>}]} {
    %c0 = arith.constant 0 : index
    %c0_0 = arith.constant 0 : index
    %0 = vector.load %arg2[%c0, %c0_0] : memref<32x16xf32, #tpu.memory_space<vmem>>, vector<32x16xf32>
    %c0_1 = arith.constant 0 : index
    %c0_2 = arith.constant 0 : index
    %c0_3 = arith.constant 0 : index
    %1 = vector.load %arg1[%c0_1, %c0_2, %c0_3] : memref<8x16x128xf32, #tpu.memory_space<vmem>>, vector<1x16x128xf32>
    %2 = vector.shape_cast %1 : vector<1x16x128xf32> to vector<16x128xf32>
    %cst = arith.constant dense<0.000000e+00> : vector<32x128xf32>
    %3 = tpu.matmul %0, %2, %cst {dimension_numbers = #tpu.dot_dimension_numbers<[1], [0], [0], [1], [0, 0, 1, 1], [], []>} : vector<32x16xf32>, vector<16x128xf32>, vector<32x128xf32> -> vector<32x128xf32>
    %c1 = arith.constant 1 : index
    %c0_4 = arith.constant 0 : index
    %c0_5 = arith.constant 0 : index
    %4 = vector.load %arg1[%c1, %c0_4, %c0_5] : memref<8x16x128xf32, #tpu.memory_space<vmem>>, vector<1x16x128xf32>
    %5 = vector.shape_cast %4 : vector<1x16x128xf32> to vector<16x128xf32>
    %cst_6 = arith.constant dense<0.000000e+00> : vector<32x128xf32>
    %6 = tpu.matmul %0, %5, %cst_6 {dimension_numbers = #tpu.dot_dimension_numbers<[1], [0], [0], [1], [0, 0, 1, 1], [], []>} : vector<32x16xf32>, vector<16x128xf32>, vector<32x128xf32> -> vector<32x128xf32>
    %7 = arith.maximumf %3, %6 : vector<32x128xf32>
    %c2 = arith.constant 2 : index
    %c0_7 = arith.constant 0 : index
    %c0_8 = arith.constant 0 : index
    %8 = vector.load %arg1[%c2, %c0_7, %c0_8] : memref<8x16x128xf32, #tpu.memory_space<vmem>>, vector<1x16x128xf32>
    %9 = vector.shape_cast %8 : vector<1x16x128xf32> to vector<16x128xf32>
    %cst_9 = arith.constant dense<0.000000e+00> : vector<32x128xf32>
    %10 = tpu.matmul %0, %9, %cst_9 {dimension_numbers = #tpu.dot_dimension_numbers<[1], [0], [0], [1], [0, 0, 1, 1], [], []>} : vector<32x16xf32>, vector<16x128xf32>, vector<32x128xf32> -> vector<32x128xf32>
    %11 = arith.maximumf %7, %10 : vector<32x128xf32>
    %c3 = arith.constant 3 : index
    %c0_10 = arith.constant 0 : index
    %c0_11 = arith.constant 0 : index
    %12 = vector.load %arg1[%c3, %c0_10, %c0_11] : memref<8x16x128xf32, #tpu.memory_space<vmem>>, vector<1x16x128xf32>
    %13 = vector.shape_cast %12 : vector<1x16x128xf32> to vector<16x128xf32>
    %cst_12 = arith.constant dense<0.000000e+00> : vector<32x128xf32>
    %14 = tpu.matmul %0, %13, %cst_12 {dimension_numbers = #tpu.dot_dimension_numbers<[1], [0], [0], [1], [0, 0, 1, 1], [], []>} : vector<32x16xf32>, vector<16x128xf32>, vector<32x128xf32> -> vector<32x128xf32>
    %15 = arith.maximumf %11, %14 : vector<32x128xf32>
    %c4 = arith.constant 4 : index
    %c0_13 = arith.constant 0 : index
    %c0_14 = arith.constant 0 : index
    %16 = vector.load %arg1[%c4, %c0_13, %c0_14] : memref<8x16x128xf32, #tpu.memory_space<vmem>>, vector<1x16x128xf32>
    %17 = vector.shape_cast %16 : vector<1x16x128xf32> to vector<16x128xf32>
    %cst_15 = arith.constant dense<0.000000e+00> : vector<32x128xf32>
    %18 = tpu.matmul %0, %17, %cst_15 {dimension_numbers = #tpu.dot_dimension_numbers<[1], [0], [0], [1], [0, 0, 1, 1], [], []>} : vector<32x16xf32>, vector<16x128xf32>, vector<32x128xf32> -> vector<32x128xf32>
    %19 = arith.maximumf %15, %18 : vector<32x128xf32>
    %c5 = arith.constant 5 : index
    %c0_16 = arith.constant 0 : index
    %c0_17 = arith.constant 0 : index
    %20 = vector.load %arg1[%c5, %c0_16, %c0_17] : memref<8x16x128xf32, #tpu.memory_space<vmem>>, vector<1x16x128xf32>
    %21 = vector.shape_cast %20 : vector<1x16x128xf32> to vector<16x128xf32>
    %cst_18 = arith.constant dense<0.000000e+00> : vector<32x128xf32>
    %22 = tpu.matmul %0, %21, %cst_18 {dimension_numbers = #tpu.dot_dimension_numbers<[1], [0], [0], [1], [0, 0, 1, 1], [], []>} : vector<32x16xf32>, vector<16x128xf32>, vector<32x128xf32> -> vector<32x128xf32>
    %23 = arith.maximumf %19, %22 : vector<32x128xf32>
    %c6 = arith.constant 6 : index
    %c0_19 = arith.constant 0 : index
    %c0_20 = arith.constant 0 : index
    %24 = vector.load %arg1[%c6, %c0_19, %c0_20] : memref<8x16x128xf32, #tpu.memory_space<vmem>>, vector<1x16x128xf32>
    %25 = vector.shape_cast %24 : vector<1x16x128xf32> to vector<16x128xf32>
    %cst_21 = arith.constant dense<0.000000e+00> : vector<32x128xf32>
    %26 = tpu.matmul %0, %25, %cst_21 {dimension_numbers = #tpu.dot_dimension_numbers<[1], [0], [0], [1], [0, 0, 1, 1], [], []>} : vector<32x16xf32>, vector<16x128xf32>, vector<32x128xf32> -> vector<32x128xf32>
    %27 = arith.maximumf %23, %26 : vector<32x128xf32>
    %c7 = arith.constant 7 : index
    %c0_22 = arith.constant 0 : index
    %c0_23 = arith.constant 0 : index
    %28 = vector.load %arg1[%c7, %c0_22, %c0_23] : memref<8x16x128xf32, #tpu.memory_space<vmem>>, vector<1x16x128xf32>
    %29 = vector.shape_cast %28 : vector<1x16x128xf32> to vector<16x128xf32>
    %cst_24 = arith.constant dense<0.000000e+00> : vector<32x128xf32>
    %30 = tpu.matmul %0, %29, %cst_24 {dimension_numbers = #tpu.dot_dimension_numbers<[1], [0], [0], [1], [0, 0, 1, 1], [], []>} : vector<32x16xf32>, vector<16x128xf32>, vector<32x128xf32> -> vector<32x128xf32>
    %31 = arith.maximumf %27, %30 : vector<32x128xf32>
    %c0_25 = arith.constant 0 : index
    %c0_26 = arith.constant 0 : index
    %32 = vector.load %arg3[%c0_25, %c0_26] : memref<32x1xf32, #tpu.memory_space<vmem>>, vector<32x1xf32>
    %33 = vector.broadcast %32 : vector<32x1xf32> to vector<32x128xf32>
    %34 = arith.addf %31, %33 : vector<32x128xf32>
    %cst_27 = arith.constant 0.000000e+00 : f32
    %35 = vector.broadcast %cst_27 : f32 to vector<32x128xf32>
    %36 = arith.maximumf %34, %35 : vector<32x128xf32>
    %c0_28 = arith.constant 0 : index
    %c0_29 = arith.constant 0 : index
    %37 = vector.load %arg4[%c0_28, %c0_29] : memref<32x128xf32, #tpu.memory_space<vmem>>, vector<32x128xf32>
    tpu.vector_store %arg4[%c0_28, %c0_29], %36 {strides = array<i32>} : memref<32x128xf32, #tpu.memory_space<vmem>>, vector<32x128xf32>,
    return
  }
  func.func @transform_0(%arg0: i32) -> (i32, i32, i32) {
    %c0_i32 = arith.constant 0 : i32
    %c0_i32_0 = arith.constant 0 : i32
    %c0_i32_1 = arith.constant 0 : i32
    return %c0_i32, %c0_i32_0, %arg0 : i32, i32, i32
  }
  func.func @transform_1(%arg0: i32) -> (i32, i32) {
    %c0_i32 = arith.constant 0 : i32
    %c0_i32_0 = arith.constant 0 : i32
    %c0_i32_1 = arith.constant 0 : i32
    return %c0_i32, %c0_i32_0 : i32, i32
  }
  func.func @transform_2(%arg0: i32) -> (i32, i32) {
    %c0_i32 = arith.constant 0 : i32
    %c0_i32_0 = arith.constant 0 : i32
    %c0_i32_1 = arith.constant 0 : i32
    return %c0_i32, %c0_i32_0 : i32, i32
  }
  func.func @transform_3(%arg0: i32) -> (i32, i32) {
    %c0_i32 = arith.constant 0 : i32
    %c0_i32_0 = arith.constant 0 : i32
    return %c0_i32, %arg0 : i32, i32
  }
}

</mosaic_0001>

<llo_original>
// kernel: tpu_custom_call.1
$region0: #{tpu_custom_call.1}
  #allocation0 [shape = 'u32[]', space=smem, size = 0x4, offset = 0x4, fixed_abs, tag = 'smem constant byte address 0x4 - core index']
  #allocation1 [shape = 'u32[144,128]{1,0:T(1,128)}', space=vmem, size = 0x12000, scoped, tag = 'internal scratch']
  %s0 = inlined_call_operand.hbm [shape: f32[8,16,256], index: 0, kind: input, shape index: {}]
  %s1 = inlined_call_operand.vmem [shape: f32[32,16], index: 1, kind: input, shape index: {}]
  %s2 = inlined_call_operand.vmem [shape: f32[32,1], index: 2, kind: input, shape index: {}]
  %s3 = inlined_call_operand.hbm [shape: f32[32,256], index: 3, kind: output, shape index: {}]
  %s4 = sld [smem:[#allocation0]]
  $region49: #{tpu_custom_call.1} parent=0
    _
  %s6 = ssub.s32 1, %s4
  %s7 = scalar_select 0, %s6, %s4
  $region1: #{tpu_custom_call.1} parent=0
    #allocation2 [shape = 'u8[131072]{0}', space=vmem, size = 0x20000, scoped, tag = 'input window, operand 0']
    #allocation3 [shape = 's32[2]{0}', space=sflag, size = 0x8, scoped, tag = 'scoped memory for tpu_custom_call.1']
    #allocation4 [shape = 's32[2]{0}', space=sflag, size = 0x8, scoped, tag = 'scoped memory for tpu_custom_call.1']
    #allocation5 [shape = 'u8[32768]{0}', space=vmem, size = 0x8000, scoped, tag = 'output window, operand 0']
    %8 = vsyncpa [#allocation3], 0
    %s9 = scalar_lea.sflag [#allocation3], 1
    %10 = vsyncpa %s9, 0
    %11 = vsyncpa [#allocation4], 0
    %s12 = scalar_lea.sflag [#allocation4], 1
    %13 = vsyncpa %s12, 0
    loop: start=0, step=1, limit=4
    $region2: #{tpu_custom_call.1} parent=1 // loop_pre_header
      _
    $region3: #{tpu_custom_call.1} parent=1 // loop_header
      %s15 = sphi 0, %s19
      %p16 = scmp.ge.s32.totalorder %s15, 4
      %s25 = sphi 0, %s27
      %s28 = sphi 0, %s25
      %s29 = sphi 0, %s28
      %s45 = sphi 0, %s29
      %s49 = sphi 0, %s49
      %s51 = sphi 0, %s49
      %s52 = sphi 0, %s51
      %s66 = sphi 0, %s52
      %s70 = sphi 0, %s70
      %s72 = sphi 0, %s70
      %s73 = sphi 0, %s72
      %s87 = sphi 0, %s73
      %s93 = sphi 0, %s95
      %s96 = sphi 0, %s93
      %s97 = sphi 0, %s96
      %s113 = sphi 0, %s97
    $region4: #{tpu_custom_call.1} parent=1 // loop_header_branch
      %18 = sbr.rel (%p16) target = $region8
    $region5: #{tpu_custom_call.1} parent=1 // loop_body
      %s20 = ssub.s32 %s15, 1
      %s21 = ssub.s32 %s15, 2
      %s22 = sadd.s32 %s15, 1
      %s23 = ssub.s32 %s15, %s22
      %p24 = scmp.eq.s32.totalorder %s23, 0
      %s26 = sadd.s32 %s25, 1
      %s27 = scalar_select %p24, %s25, %s26
      %p30 = pneg %p24
      %p31 = scmp.eq.s32.totalorder %s15, 1
      %p32 = por %p30, %p31
      %p33 = scmp.ne.s32.totalorder %s25, %s28
      %p34 = scmp.eq.s32.totalorder %s15, 0
      %p35 = por %p33, %p34
      %p36 = scmp.ne.s32.totalorder %s25, %s28
      %p37 = scmp.eq.s32.totalorder %s20, 1
      %p38 = por %p36, %p37
      %p39 = scmp.ne.s32.totalorder %s28, %s29
      %p40 = scmp.eq.s32.totalorder %s20, 0
      %p41 = por %p39, %p40
      %p42 = scmp.ne.s32.totalorder %s28, %s29
      %p43 = scmp.eq.s32.totalorder %s21, 1
      %p44 = por %p42, %p43
      %p46 = scmp.ne.s32.totalorder %s29, %s45
      %p47 = scmp.eq.s32.totalorder %s21, 0
      %p48 = por %p46, %p47
      %s50 = sadd.s32 %s49, 1
      %p53 = scmp.eq.s32.totalorder %s15, 1
      %p54 = scmp.ne.s32.totalorder %s49, %s51
      %p55 = scmp.eq.s32.totalorder %s15, 0
      %p56 = por %p54, %p55
      %p57 = scmp.ne.s32.totalorder %s49, %s51
      %p58 = scmp.eq.s32.totalorder %s20, 1
      %p59 = por %p57, %p58
      %p60 = scmp.ne.s32.totalorder %s51, %s52
      %p61 = scmp.eq.s32.totalorder %s20, 0
      %p62 = por %p60, %p61
      %p63 = scmp.ne.s32.totalorder %s51, %s52
      %p64 = scmp.eq.s32.totalorder %s21, 1
      %p65 = por %p63, %p64
      %p67 = scmp.ne.s32.totalorder %s52, %s66
      %p68 = scmp.eq.s32.totalorder %s21, 0
      %p69 = por %p67, %p68
      %s71 = sadd.s32 %s70, 1
      %p74 = scmp.eq.s32.totalorder %s15, 1
      %p75 = scmp.ne.s32.totalorder %s70, %s72
      %p76 = scmp.eq.s32.totalorder %s15, 0
      %p77 = por %p75, %p76
      %p78 = scmp.ne.s32.totalorder %s70, %s72
      %p79 = scmp.eq.s32.totalorder %s20, 1
      %p80 = por %p78, %p79
      %p81 = scmp.ne.s32.totalorder %s72, %s73
      %p82 = scmp.eq.s32.totalorder %s20, 0
      %p83 = por %p81, %p82
      %p84 = scmp.ne.s32.totalorder %s72, %s73
      %p85 = scmp.eq.s32.totalorder %s21, 1
      %p86 = por %p84, %p85
      %p88 = scmp.ne.s32.totalorder %s73, %s87
      %p89 = scmp.eq.s32.totalorder %s21, 0
      %p90 = por %p88, %p89
      %s91 = ssub.s32 %s15, %s22
      %p92 = scmp.eq.s32.totalorder %s91, 0
      %s94 = sadd.s32 %s93, 1
      %s95 = scalar_select %p92, %s93, %s94
      %p98 = pneg %p92
      %p99 = scmp.eq.s32.totalorder %s15, 1
      %p100 = por %p98, %p99
      %p101 = scmp.ne.s32.totalorder %s93, %s96
      %p102 = scmp.eq.s32.totalorder %s15, 0
      %p103 = por %p101, %p102
      %p104 = scmp.ne.s32.totalorder %s93, %s96
      %p105 = scmp.eq.s32.totalorder %s20, 1
      %p106 = por %p104, %p105
      %p107 = scmp.ne.s32.totalorder %s96, %s97
      %p108 = scmp.eq.s32.totalorder %s20, 0
      %p109 = por %p107, %p108
      %p110 = scmp.ne.s32.totalorder %s96, %s97
      %p111 = scmp.eq.s32.totalorder %s21, 1
      %p112 = por %p110, %p111
      %p114 = scmp.ne.s32.totalorder %s97, %s113
      %p115 = scmp.eq.s32.totalorder %s21, 0
      %p116 = por %p114, %p115
      %p117 = scmp.le.s32.totalorder 1, %s15
      %p118 = scmp.lt.s32.totalorder %s15, 3
      %p119 = pnand %p117, %p118
      %p120 = pneg %p119
      // Predicated region
      $region9: #{tpu_custom_call.1} parent=5 // pred_check
        _
      $region10: #{tpu_custom_call.1} parent=5 // pred_check_branch
        %122 = sbr.rel (%p119) target = $region12
      $region11: #{tpu_custom_call.1} parent=5 // pred_region
        %s123 = ssub.s32 %s15, 1
        // Predicated region
        $region13: #{tpu_custom_call.1} parent=11 // pred_check
          %p124 = pneg %p62
        $region14: #{tpu_custom_call.1} parent=11 // pred_check_branch
          %126 = sbr.rel (%p124) target = $region16
        $region15: #{tpu_custom_call.1} parent=11 // pred_region
          _
        $region16: #{tpu_custom_call.1} parent=11 // pred_fallthru
          _
        // Predicated region
        $region17: #{tpu_custom_call.1} parent=11 // pred_check
          %p127 = pneg %p83
        $region18: #{tpu_custom_call.1} parent=11 // pred_check_branch
          %129 = sbr.rel (%p127) target = $region20
        $region19: #{tpu_custom_call.1} parent=11 // pred_region
          _
        $region20: #{tpu_custom_call.1} parent=11 // pred_fallthru
          _
      $region12: #{tpu_custom_call.1} parent=5 // pred_fallthru
        _
      %p130 = scmp.lt.s32.totalorder %s15, 2
      // Predicated region
      $region21: #{tpu_custom_call.1} parent=5 // pred_check
        %p131 = pneg %p130
      $region22: #{tpu_custom_call.1} parent=5 // pred_check_branch
        %133 = sbr.rel (%p131) target = $region24
      $region23: #{tpu_custom_call.1} parent=5 // pred_region
        // Predicated region
        $region25: #{tpu_custom_call.1} parent=23 // pred_check
          %p134 = pneg %p35
        $region26: #{tpu_custom_call.1} parent=23 // pred_check_branch
          %136 = sbr.rel (%p134) target = $region28
        $region27: #{tpu_custom_call.1} parent=23 // pred_region
          %s137 = sand.u32 %s25, 1
          %s138 = scalar_lea.sflag [#allocation3], %s137
          %s139 = sand.u32 %s25, 1
          %s140 = smul.addr %s139, 128
          %s141 = scalar_lea.vmem [#allocation2], %s140
          %s143 = ssub.s32 2048, 2048
          %144 = vsyncadd %s138, %s143
          %s145 = smul.addr %s15, 128
          %s146 = scalar_lea.hbm %s0, %s145
          %s147 = sshll.u32 %s141, 4
          %s148 = int_to_ptr.vmem [resolvable:$true] %s147
          %153 = dma.hbm_to_vmem [thread:$0]  %s146, 2048, %s148, %s138, 256, 128, 8
        $region28: #{tpu_custom_call.1} parent=23 // pred_fallthru
          _
      $region24: #{tpu_custom_call.1} parent=5 // pred_fallthru
        _
      %p154 = scmp.le.s32.totalorder 1, %s15
      %p155 = scmp.lt.s32.totalorder %s15, 3
      %p156 = pnand %p154, %p155
      %p157 = pneg %p156
      // Predicated region
      $region29: #{tpu_custom_call.1} parent=5 // pred_check
        _
      $region30: #{tpu_custom_call.1} parent=5 // pred_check_branch
        %159 = sbr.rel (%p156) target = $region32
      $region31: #{tpu_custom_call.1} parent=5 // pred_region
        %s160 = ssub.s32 %s15, 1
        %s161 = sand.u32 %s28, 1
        %s162 = scalar_lea.sflag [#allocation3], %s161
        %s163 = sand.u32 %s28, 1
        %s164 = smul.addr %s163, 128
        %s165 = scalar_lea.vmem [#allocation2], %s164
        // Predicated region
        $region33: #{tpu_custom_call.1} parent=31 // pred_check
          %p166 = pneg %p41
        $region34: #{tpu_custom_call.1} parent=31 // pred_check_branch
          %168 = sbr.rel (%p166) target = $region36
        $region35: #{tpu_custom_call.1} parent=31 // pred_region
          %169 = dma.done %s162, 2048
        $region36: #{tpu_custom_call.1} parent=31 // pred_fallthru
          _
        %s170 = sand.u32 %s28, 1
        %s171 = scalar_lea.sflag [#allocation3], %s170
        %s172 = sand.u32 %s28, 1
        %s173 = smul.addr %s172, 128
        %s174 = scalar_lea.vmem [#allocation2], %s173
        %p175 = pneg %p41
        %p176 = pneg %p38
        %p177 = pneg %p62
        %p178 = pneg %p59
        %p179 = pneg %p83
        %p180 = pneg %p80
        %p181 = pneg %p109
        %p182 = pneg %p106
        %s183 = sand.u32 %s96, 1
        %s184 = scalar_lea.sflag [#allocation4], %s183
        %s185 = sand.u32 %s96, 1
        %s186 = smul.addr %s185, 32
        %s187 = scalar_lea.vmem [#allocation5], %s186
        %v188 = vld [vmem:[%s1] sm:$0xff]
        %v189 = vld [vmem:[%s1 + $0x8] sm:$0xff]
        %v190 = vld [vmem:[%s1 + $0x10] sm:$0xff]
        %v191 = vld [vmem:[%s1 + $0x18] sm:$0xff]
        %v192 = vld [vmem:[%s165] sm:$0xff]
        %v193 = vld [vmem:[%s165 + $0x8] sm:$0xff]
        %vm194 = vcmask 130048
        %v196 = vsel %vm194, %v188, 0
        %v199 = vsel %vm194, %v189, 0
        %v202 = vsel %vm194, %v190, 0
        %v205 = vsel %vm194, %v191, 0
        %207 = vmatprep.subr.mxu0 0.0
        %208 = vmatpush1.msra.mxu0 %v192
        %209 = vmatprep.subr.mxu0 0.0
        %210 = vmatpush1.msra.mxu0 %v193
        %211 = vmatprep.subr.mxu0 0.0
        %212 = vmatpush1.msra.mxu0 0.0
        %213 = vmatprep.subr.mxu0 0.0
        %214 = vmatpush1.msra.mxu0 0.0
        %215 = vmatprep.subr.mxu0 0.0
        %216 = vmatpush1.msra.mxu0 0.0
        %217 = vmatprep.subr.mxu0 0.0
        %218 = vmatpush1.msra.mxu0 0.0
        %219 = vmatprep.subr.mxu0 0.0
        %220 = vmatpush1.msra.mxu0 0.0
        %221 = vmatprep.subr.mxu0 0.0
        %222 = vmatpush1.msra.mxu0 0.0
        %223 = vmatprep.subr.mxu0 0.0
        %224 = vmatpush1.msra.mxu0 0.0
        %225 = vmatprep.subr.mxu0 0.0
        %226 = vmatpush1.msra.mxu0 0.0
        %227 = vmatprep.subr.mxu0 0.0
        %228 = vmatpush1.msra.mxu0 0.0
        %229 = vmatprep.subr.mxu0 0.0
        %230 = vmatpush1.msra.mxu0 0.0
        %231 = vmatprep.subr.mxu0 0.0
        %232 = vmatpush1.msra.mxu0 0.0
        %233 = vmatprep.subr.mxu0 0.0
        %234 = vmatpush1.msra.mxu0 0.0
        %235 = vmatprep.subr.mxu0 0.0
        %236 = vmatpush1.msra.mxu0 0.0
        %237 = vmatprep.subr.mxu0 0.0
        %238 = vmatpush1.msra.mxu0 0.0
        %239 = vmatprep.subr.mxu0 0.0
        %240 = vmatpush1.msra.mxu0 0.0
        %241 = vmatprep.subr.mxu0 0.0
        %242 = vmatpush1.msra.mxu0 0.0
        %243 = vmatprep.subr.mxu0 0.0
        %244 = vmatpush1.msra.mxu0 0.0
        %245 = vmatprep.subr.mxu0 0.0
        %246 = vmatpush1.msra.mxu0 0.0
        %247 = vmatprep.subr.mxu0 0.0
        %248 = vmatpush1.msra.mxu0 0.0
        %249 = vmatprep.subr.mxu0 0.0
        %250 = vmatpush1.msra.mxu0 0.0
        %251 = vmatprep.subr.mxu0 0.0
        %252 = vmatpush1.msra.mxu0 0.0
        %253 = vmatprep.subr.mxu0 0.0
        %254 = vmatpush1.msra.mxu0 0.0
        %255 = vmatprep.subr.mxu0 0.0
        %256 = vmatpush1.msra.mxu0 0.0
        %257 = vmatprep.subr.mxu0 0.0
        %258 = vmatpush1.msra.mxu0 0.0
        %259 = vmatprep.subr.mxu0 0.0
        %260 = vmatpush1.msra.mxu0 0.0
        %261 = vmatprep.subr.mxu0 0.0
        %262 = vmatpush1.msra.mxu0 0.0
        %263 = vmatprep.subr.mxu0 0.0
        %264 = vmatpush1.msra.mxu0 0.0
        %265 = vmatprep.subr.mxu0 0.0
        %266 = vmatpush1.msra.mxu0 0.0
        %267 = vmatprep.subr.mxu0 0.0
        %268 = vmatpush1.msra.mxu0 0.0
        %269 = vmatprep.subr.mxu0 0.0
        %270 = vmatpush1.msra.mxu0 0.0
        %271 = vmatprep.mubr.f32.mxu0 0.0
        %272 = vmatmul.mubr.f32.gmra.mrb[0].mxu0 %v196
        %v273 = vpop.f32.mrb[0].mxu0
        %v274 = vadd.f32 0.0, %v273
        %v275 = vpop.f32.mrb[0].mxu0
        %276 = vmatprep.mubr.f32.mxu0 0.0
        %277 = vmatmul.mubr.f32.gmra.mrb[0].mxu0 %v199
        %v278 = vpop.f32.mrb[0].mxu0
        %v279 = vadd.f32 0.0, %v278
        %v280 = vpop.f32.mrb[0].mxu0
        %281 = vmatprep.mubr.f32.mxu0 0.0
        %282 = vmatmul.mubr.f32.gmra.mrb[0].mxu0 %v202
        %v283 = vpop.f32.mrb[0].mxu0
        %v284 = vadd.f32 0.0, %v283
        %v285 = vpop.f32.mrb[0].mxu0
        %286 = vmatprep.mubr.f32.mxu0 0.0
        %287 = vmatmul.mubr.f32.gmra.mrb[0].mxu0 %v205
        %v288 = vpop.f32.mrb[0].mxu0
        %v289 = vadd.f32 0.0, %v288
        %v290 = vpop.f32.mrb[0].mxu0
        %291 = vdwg.mxu0
        %s292 = scalar_lea.vmem %s165, 16 [#allocation2]
        %v293 = vld [vmem:[%s292] sm:$0xff]
        %v294 = vld [vmem:[%s292 + $0x8] sm:$0xff]
        %295 = vmatprep.subr.mxu0 0.0
        %296 = vmatpush1.msra.mxu0 %v293
        %297 = vmatprep.subr.mxu0 0.0
        %298 = vmatpush1.msra.mxu0 %v294
        %299 = vmatprep.subr.mxu0 0.0
        %300 = vmatpush1.msra.mxu0 0.0
        %301 = vmatprep.subr.mxu0 0.0
        %302 = vmatpush1.msra.mxu0 0.0
        %303 = vmatprep.subr.mxu0 0.0
        %304 = vmatpush1.msra.mxu0 0.0
        %305 = vmatprep.subr.mxu0 0.0
        %306 = vmatpush1.msra.mxu0 0.0
        %307 = vmatprep.subr.mxu0 0.0
        %308 = vmatpush1.msra.mxu0 0.0
        %309 = vmatprep.subr.mxu0 0.0
        %310 = vmatpush1.msra.mxu0 0.0
        %311 = vmatprep.subr.mxu0 0.0
        %312 = vmatpush1.msra.mxu0 0.0
        %313 = vmatprep.subr.mxu0 0.0
        %314 = vmatpush1.msra.mxu0 0.0
        %315 = vmatprep.subr.mxu0 0.0
        %316 = vmatpush1.msra.mxu0 0.0
        %317 = vmatprep.subr.mxu0 0.0
        %318 = vmatpush1.msra.mxu0 0.0
        %319 = vmatprep.subr.mxu0 0.0
        %320 = vmatpush1.msra.mxu0 0.0
        %321 = vmatprep.subr.mxu0 0.0
        %322 = vmatpush1.msra.mxu0 0.0
        %323 = vmatprep.subr.mxu0 0.0
        %324 = vmatpush1.msra.mxu0 0.0
        %325 = vmatprep.subr.mxu0 0.0
        %326 = vmatpush1.msra.mxu0 0.0
        %327 = vmatprep.subr.mxu0 0.0
        %328 = vmatpush1.msra.mxu0 0.0
        %329 = vmatprep.subr.mxu0 0.0
        %330 = vmatpush1.msra.mxu0 0.0
        %331 = vmatprep.subr.mxu0 0.0
        %332 = vmatpush1.msra.mxu0 0.0
        %333 = vmatprep.subr.mxu0 0.0
        %334 = vmatpush1.msra.mxu0 0.0
        %335 = vmatprep.subr.mxu0 0.0
        %336 = vmatpush1.msra.mxu0 0.0
        %337 = vmatprep.subr.mxu0 0.0
        %338 = vmatpush1.msra.mxu0 0.0
        %339 = vmatprep.subr.mxu0 0.0
        %340 = vmatpush1.msra.mxu0 0.0
        %341 = vmatprep.subr.mxu0 0.0
        %342 = vmatpush1.msra.mxu0 0.0
        %343 = vmatprep.subr.mxu0 0.0
        %344 = vmatpush1.msra.mxu0 0.0
        %345 = vmatprep.subr.mxu0 0.0
        %346 = vmatpush1.msra.mxu0 0.0
        %347 = vmatprep.subr.mxu0 0.0
        %348 = vmatpush1.msra.mxu0 0.0
        %349 = vmatprep.subr.mxu0 0.0
        %350 = vmatpush1.msra.mxu0 0.0
        %351 = vmatprep.subr.mxu0 0.0
        %352 = vmatpush1.msra.mxu0 0.0
        %353 = vmatprep.subr.mxu0 0.0
        %354 = vmatpush1.msra.mxu0 0.0
        %355 = vmatprep.subr.mxu0 0.0
        %356 = vmatpush1.msra.mxu0 0.0
        %357 = vmatprep.subr.mxu0 0.0
        %358 = vmatpush1.msra.mxu0 0.0
        %359 = vmatprep.mubr.f32.mxu0 0.0
        %360 = vmatmul.mubr.f32.gmra.mrb[0].mxu0 %v196
        %v361 = vpop.f32.mrb[0].mxu0
        %v362 = vadd.f32 0.0, %v361
        %v363 = vpop.f32.mrb[0].mxu0
        %364 = vmatprep.mubr.f32.mxu0 0.0
        %365 = vmatmul.mubr.f32.gmra.mrb[0].mxu0 %v199
        %v366 = vpop.f32.mrb[0].mxu0
        %v367 = vadd.f32 0.0, %v366
        %v368 = vpop.f32.mrb[0].mxu0
        %369 = vmatprep.mubr.f32.mxu0 0.0
        %370 = vmatmul.mubr.f32.gmra.mrb[0].mxu0 %v202
        %v371 = vpop.f32.mrb[0].mxu0
        %v372 = vadd.f32 0.0, %v371
        %v373 = vpop.f32.mrb[0].mxu0
        %374 = vmatprep.mubr.f32.mxu0 0.0
        %375 = vmatmul.mubr.f32.gmra.mrb[0].mxu0 %v205
        %v376 = vpop.f32.mrb[0].mxu0
        %v377 = vadd.f32 0.0, %v376
        %v378 = vpop.f32.mrb[0].mxu0
        %379 = vdwg.mxu0
        %v380 = vmax.f32 %v274, %v362
        %v381 = vmax.f32 %v279, %v367
        %v382 = vmax.f32 %v284, %v372
        %v383 = vmax.f32 %v289, %v377
        %s384 = scalar_lea.vmem %s165, 32 [#allocation2]
        %v385 = vld [vmem:[%s384] sm:$0xff]
        %v386 = vld [vmem:[%s384 + $0x8] sm:$0xff]
        %387 = vmatprep.subr.mxu0 0.0
        %388 = vmatpush1.msra.mxu0 %v385
        %389 = vmatprep.subr.mxu0 0.0
        %390 = vmatpush1.msra.mxu0 %v386
        %391 = vmatprep.subr.mxu0 0.0
        %392 = vmatpush1.msra.mxu0 0.0
        %393 = vmatprep.subr.mxu0 0.0
        %394 = vmatpush1.msra.mxu0 0.0
        %395 = vmatprep.subr.mxu0 0.0
        %396 = vmatpush1.msra.mxu0 0.0
        %397 = vmatprep.subr.mxu0 0.0
        %398 = vmatpush1.msra.mxu0 0.0
        %399 = vmatprep.subr.mxu0 0.0
        %400 = vmatpush1.msra.mxu0 0.0
        %401 = vmatprep.subr.mxu0 0.0
        %402 = vmatpush1.msra.mxu0 0.0
        %403 = vmatprep.subr.mxu0 0.0
        %404 = vmatpush1.msra.mxu0 0.0
        %405 = vmatprep.subr.mxu0 0.0
        %406 = vmatpush1.msra.mxu0 0.0
        %407 = vmatprep.subr.mxu0 0.0
        %408 = vmatpush1.msra.mxu0 0.0
        %409 = vmatprep.subr.mxu0 0.0
        %410 = vmatpush1.msra.mxu0 0.0
        %411 = vmatprep.subr.mxu0 0.0
        %412 = vmatpush1.msra.mxu0 0.0
        %413 = vmatprep.subr.mxu0 0.0
        %414 = vmatpush1.msra.mxu0 0.0
        %415 = vmatprep.subr.mxu0 0.0
        %416 = vmatpush1.msra.mxu0 0.0
        %417 = vmatprep.subr.mxu0 0.0
        %418 = vmatpush1.msra.mxu0 0.0
        %419 = vmatprep.subr.mxu0 0.0
        %420 = vmatpush1.msra.mxu0 0.0
        %421 = vmatprep.subr.mxu0 0.0
        %422 = vmatpush1.msra.mxu0 0.0
        %423 = vmatprep.subr.mxu0 0.0
        %424 = vmatpush1.msra.mxu0 0.0
        %425 = vmatprep.subr.mxu0 0.0
        %426 = vmatpush1.msra.mxu0 0.0
        %427 = vmatprep.subr.mxu0 0.0
        %428 = vmatpush1.msra.mxu0 0.0
        %429 = vmatprep.subr.mxu0 0.0
        %430 = vmatpush1.msra.mxu0 0.0
        %431 = vmatprep.subr.mxu0 0.0
        %432 = vmatpush1.msra.mxu0 0.0
        %433 = vmatprep.subr.mxu0 0.0
        %434 = vmatpush1.msra.mxu0 0.0
        %435 = vmatprep.subr.mxu0 0.0
        %436 = vmatpush1.msra.mxu0 0.0
        %437 = vmatprep.subr.mxu0 0.0
        %438 = vmatpush1.msra.mxu0 0.0
        %439 = vmatprep.subr.mxu0 0.0
        %440 = vmatpush1.msra.mxu0 0.0
        %441 = vmatprep.subr.mxu0 0.0
        %442 = vmatpush1.msra.mxu0 0.0
        %443 = vmatprep.subr.mxu0 0.0
        %444 = vmatpush1.msra.mxu0 0.0
        %445 = vmatprep.subr.mxu0 0.0
        %446 = vmatpush1.msra.mxu0 0.0
        %447 = vmatprep.subr.mxu0 0.0
        %448 = vmatpush1.msra.mxu0 0.0
        %449 = vmatprep.subr.mxu0 0.0
        %450 = vmatpush1.msra.mxu0 0.0
        %451 = vmatprep.mubr.f32.mxu0 0.0
        %452 = vmatmul.mubr.f32.gmra.mrb[0].mxu0 %v196
        %v453 = vpop.f32.mrb[0].mxu0
        %v454 = vadd.f32 0.0, %v453
        %v455 = vpop.f32.mrb[0].mxu0
        %456 = vmatprep.mubr.f32.mxu0 0.0
        %457 = vmatmul.mubr.f32.gmra.mrb[0].mxu0 %v199
        %v458 = vpop.f32.mrb[0].mxu0
        %v459 = vadd.f32 0.0, %v458
        %v460 = vpop.f32.mrb[0].mxu0
        %461 = vmatprep.mubr.f32.mxu0 0.0
        %462 = vmatmul.mubr.f32.gmra.mrb[0].mxu0 %v202
        %v463 = vpop.f32.mrb[0].mxu0
        %v464 = vadd.f32 0.0, %v463
        %v465 = vpop.f32.mrb[0].mxu0
        %466 = vmatprep.mubr.f32.mxu0 0.0
        %467 = vmatmul.mubr.f32.gmra.mrb[0].mxu0 %v205
        %v468 = vpop.f32.mrb[0].mxu0
        %v469 = vadd.f32 0.0, %v468
        %v470 = vpop.f32.mrb[0].mxu0
        %471 = vdwg.mxu0
        %v472 = vmax.f32 %v380, %v454
        %v473 = vmax.f32 %v381, %v459
        %v474 = vmax.f32 %v382, %v464
        %v475 = vmax.f32 %v383, %v469
        %s476 = scalar_lea.vmem %s165, 48 [#allocation2]
        %v477 = vld [vmem:[%s476] sm:$0xff]
        %v478 = vld [vmem:[%s476 + $0x8] sm:$0xff]
        %479 = vmatprep.subr.mxu0 0.0
        %480 = vmatpush1.msra.mxu0 %v477
        %481 = vmatprep.subr.mxu0 0.0
        %482 = vmatpush1.msra.mxu0 %v478
        %483 = vmatprep.subr.mxu0 0.0
        %484 = vmatpush1.msra.mxu0 0.0
        %485 = vmatprep.subr.mxu0 0.0
        %486 = vmatpush1.msra.mxu0 0.0
        %487 = vmatprep.subr.mxu0 0.0
        %488 = vmatpush1.msra.mxu0 0.0
        %489 = vmatprep.subr.mxu0 0.0
        %490 = vmatpush1.msra.mxu0 0.0
        %491 = vmatprep.subr.mxu0 0.0
        %492 = vmatpush1.msra.mxu0 0.0
        %493 = vmatprep.subr.mxu0 0.0
        %494 = vmatpush1.msra.mxu0 0.0
        %495 = vmatprep.subr.mxu0 0.0
        %496 = vmatpush1.msra.mxu0 0.0
        %497 = vmatprep.subr.mxu0 0.0
        %498 = vmatpush1.msra.mxu0 0.0
        %499 = vmatprep.subr.mxu0 0.0
        %500 = vmatpush1.msra.mxu0 0.0
        %501 = vmatprep.subr.mxu0 0.0
        %502 = vmatpush1.msra.mxu0 0.0
        %503 = vmatprep.subr.mxu0 0.0
        %504 = vmatpush1.msra.mxu0 0.0
        %505 = vmatprep.subr.mxu0 0.0
        %506 = vmatpush1.msra.mxu0 0.0
        %507 = vmatprep.subr.mxu0 0.0
        %508 = vmatpush1.msra.mxu0 0.0
        %509 = vmatprep.subr.mxu0 0.0
        %510 = vmatpush1.msra.mxu0 0.0
        %511 = vmatprep.subr.mxu0 0.0
        %512 = vmatpush1.msra.mxu0 0.0
        %513 = vmatprep.subr.mxu0 0.0
        %514 = vmatpush1.msra.mxu0 0.0
        %515 = vmatprep.subr.mxu0 0.0
        %516 = vmatpush1.msra.mxu0 0.0
        %517 = vmatprep.subr.mxu0 0.0
        %518 = vmatpush1.msra.mxu0 0.0
        %519 = vmatprep.subr.mxu0 0.0
        %520 = vmatpush1.msra.mxu0 0.0
        %521 = vmatprep.subr.mxu0 0.0
        %522 = vmatpush1.msra.mxu0 0.0
        %523 = vmatprep.subr.mxu0 0.0
        %524 = vmatpush1.msra.mxu0 0.0
        %525 = vmatprep.subr.mxu0 0.0
        %526 = vmatpush1.msra.mxu0 0.0
        %527 = vmatprep.subr.mxu0 0.0
        %528 = vmatpush1.msra.mxu0 0.0
        %529 = vmatprep.subr.mxu0 0.0
        %530 = vmatpush1.msra.mxu0 0.0
        %531 = vmatprep.subr.mxu0 0.0
        %532 = vmatpush1.msra.mxu0 0.0
        %533 = vmatprep.subr.mxu0 0.0
        %534 = vmatpush1.msra.mxu0 0.0
        %535 = vmatprep.subr.mxu0 0.0
        %536 = vmatpush1.msra.mxu0 0.0
        %537 = vmatprep.subr.mxu0 0.0
        %538 = vmatpush1.msra.mxu0 0.0
        %539 = vmatprep.subr.mxu0 0.0
        %540 = vmatpush1.msra.mxu0 0.0
        %541 = vmatprep.subr.mxu0 0.0
        %542 = vmatpush1.msra.mxu0 0.0
        %543 = vmatprep.mubr.f32.mxu0 0.0
        %544 = vmatmul.mubr.f32.gmra.mrb[0].mxu0 %v196
        %v545 = vpop.f32.mrb[0].mxu0
        %v546 = vadd.f32 0.0, %v545
        %v547 = vpop.f32.mrb[0].mxu0
        %548 = vmatprep.mubr.f32.mxu0 0.0
        %549 = vmatmul.mubr.f32.gmra.mrb[0].mxu0 %v199
        %v550 = vpop.f32.mrb[0].mxu0
        %v551 = vadd.f32 0.0, %v550
        %v552 = vpop.f32.mrb[0].mxu0
        %553 = vmatprep.mubr.f32.mxu0 0.0
        %554 = vmatmul.mubr.f32.gmra.mrb[0].mxu0 %v202
        %v555 = vpop.f32.mrb[0].mxu0
        %v556 = vadd.f32 0.0, %v555
        %v557 = vpop.f32.mrb[0].mxu0
        %558 = vmatprep.mubr.f32.mxu0 0.0
        %559 = vmatmul.mubr.f32.gmra.mrb[0].mxu0 %v205
        %v560 = vpop.f32.mrb[0].mxu0
        %v561 = vadd.f32 0.0, %v560
        %v562 = vpop.f32.mrb[0].mxu0
        %563 = vdwg.mxu0
        %v564 = vmax.f32 %v472, %v546
        %v565 = vmax.f32 %v473, %v551
        %v566 = vmax.f32 %v474, %v556
        %v567 = vmax.f32 %v475, %v561
        %s568 = scalar_lea.vmem %s165, 64 [#allocation2]
        %v569 = vld [vmem:[%s568] sm:$0xff]
        %v570 = vld [vmem:[%s568 + $0x8] sm:$0xff]
        %571 = vmatprep.subr.mxu0 0.0
        %572 = vmatpush1.msra.mxu0 %v569
        %573 = vmatprep.subr.mxu0 0.0
        %574 = vmatpush1.msra.mxu0 %v570
        %575 = vmatprep.subr.mxu0 0.0
        %576 = vmatpush1.msra.mxu0 0.0
        %577 = vmatprep.subr.mxu0 0.0
        %578 = vmatpush1.msra.mxu0 0.0
        %579 = vmatprep.subr.mxu0 0.0
        %580 = vmatpush1.msra.mxu0 0.0
        %581 = vmatprep.subr.mxu0 0.0
        %582 = vmatpush1.msra.mxu0 0.0
        %583 = vmatprep.subr.mxu0 0.0
        %584 = vmatpush1.msra.mxu0 0.0
        %585 = vmatprep.subr.mxu0 0.0
        %586 = vmatpush1.msra.mxu0 0.0
        %587 = vmatprep.subr.mxu0 0.0
        %588 = vmatpush1.msra.mxu0 0.0
        %589 = vmatprep.subr.mxu0 0.0
        %590 = vmatpush1.msra.mxu0 0.0
        %591 = vmatprep.subr.mxu0 0.0
        %592 = vmatpush1.msra.mxu0 0.0
        %593 = vmatprep.subr.mxu0 0.0
        %594 = vmatpush1.msra.mxu0 0.0
        %595 = vmatprep.subr.mxu0 0.0
        %596 = vmatpush1.msra.mxu0 0.0
        %597 = vmatprep.subr.mxu0 0.0
        %598 = vmatpush1.msra.mxu0 0.0
        %599 = vmatprep.subr.mxu0 0.0
        %600 = vmatpush1.msra.mxu0 0.0
        %601 = vmatprep.subr.mxu0 0.0
        %602 = vmatpush1.msra.mxu0 0.0
        %603 = vmatprep.subr.mxu0 0.0
        %604 = vmatpush1.msra.mxu0 0.0
        %605 = vmatprep.subr.mxu0 0.0
        %606 = vmatpush1.msra.mxu0 0.0
        %607 = vmatprep.subr.mxu0 0.0
        %608 = vmatpush1.msra.mxu0 0.0
        %609 = vmatprep.subr.mxu0 0.0
        %610 = vmatpush1.msra.mxu0 0.0
        %611 = vmatprep.subr.mxu0 0.0
        %612 = vmatpush1.msra.mxu0 0.0
        %613 = vmatprep.subr.mxu0 0.0
        %614 = vmatpush1.msra.mxu0 0.0
        %615 = vmatprep.subr.mxu0 0.0
        %616 = vmatpush1.msra.mxu0 0.0
        %617 = vmatprep.subr.mxu0 0.0
        %618 = vmatpush1.msra.mxu0 0.0
        %619 = vmatprep.subr.mxu0 0.0
        %620 = vmatpush1.msra.mxu0 0.0
        %621 = vmatprep.subr.mxu0 0.0
        %622 = vmatpush1.msra.mxu0 0.0
        %623 = vmatprep.subr.mxu0 0.0
        %624 = vmatpush1.msra.mxu0 0.0
        %625 = vmatprep.subr.mxu0 0.0
        %626 = vmatpush1.msra.mxu0 0.0
        %627 = vmatprep.subr.mxu0 0.0
        %628 = vmatpush1.msra.mxu0 0.0
        %629 = vmatprep.subr.mxu0 0.0
        %630 = vmatpush1.msra.mxu0 0.0
        %631 = vmatprep.subr.mxu0 0.0
        %632 = vmatpush1.msra.mxu0 0.0
        %633 = vmatprep.subr.mxu0 0.0
        %634 = vmatpush1.msra.mxu0 0.0
        %635 = vmatprep.mubr.f32.mxu0 0.0
        %636 = vmatmul.mubr.f32.gmra.mrb[0].mxu0 %v196
        %v637 = vpop.f32.mrb[0].mxu0
        %v638 = vadd.f32 0.0, %v637
        %v639 = vpop.f32.mrb[0].mxu0
        %640 = vmatprep.mubr.f32.mxu0 0.0
        %641 = vmatmul.mubr.f32.gmra.mrb[0].mxu0 %v199
        %v642 = vpop.f32.mrb[0].mxu0
        %v643 = vadd.f32 0.0, %v642
        %v644 = vpop.f32.mrb[0].mxu0
        %645 = vmatprep.mubr.f32.mxu0 0.0
        %646 = vmatmul.mubr.f32.gmra.mrb[0].mxu0 %v202
        %v647 = vpop.f32.mrb[0].mxu0
        %v648 = vadd.f32 0.0, %v647
        %v649 = vpop.f32.mrb[0].mxu0
        %650 = vmatprep.mubr.f32.mxu0 0.0
        %651 = vmatmul.mubr.f32.gmra.mrb[0].mxu0 %v205
        %v652 = vpop.f32.mrb[0].mxu0
        %v653 = vadd.f32 0.0, %v652
        %v654 = vpop.f32.mrb[0].mxu0
        %655 = vdwg.mxu0
        %v656 = vmax.f32 %v564, %v638
        %v657 = vmax.f32 %v565, %v643
        %v658 = vmax.f32 %v566, %v648
        %v659 = vmax.f32 %v567, %v653
        %s660 = scalar_lea.vmem %s165, 80 [#allocation2]
        %v661 = vld [vmem:[%s660] sm:$0xff]
        %v662 = vld [vmem:[%s660 + $0x8] sm:$0xff]
        %663 = vmatprep.subr.mxu0 0.0
        %664 = vmatpush1.msra.mxu0 %v661
        %665 = vmatprep.subr.mxu0 0.0
        %666 = vmatpush1.msra.mxu0 %v662
        %667 = vmatprep.subr.mxu0 0.0
        %668 = vmatpush1.msra.mxu0 0.0
        %669 = vmatprep.subr.mxu0 0.0
        %670 = vmatpush1.msra.mxu0 0.0
        %671 = vmatprep.subr.mxu0 0.0
        %672 = vmatpush1.msra.mxu0 0.0
        %673 = vmatprep.subr.mxu0 0.0
        %674 = vmatpush1.msra.mxu0 0.0
        %675 = vmatprep.subr.mxu0 0.0
        %676 = vmatpush1.msra.mxu0 0.0
        %677 = vmatprep.subr.mxu0 0.0
        %678 = vmatpush1.msra.mxu0 0.0
        %679 = vmatprep.subr.mxu0 0.0
        %680 = vmatpush1.msra.mxu0 0.0
        %681 = vmatprep.subr.mxu0 0.0
        %682 = vmatpush1.msra.mxu0 0.0
        %683 = vmatprep.subr.mxu0 0.0
        %684 = vmatpush1.msra.mxu0 0.0
        %685 = vmatprep.subr.mxu0 0.0
        %686 = vmatpush1.msra.mxu0 0.0
        %687 = vmatprep.subr.mxu0 0.0
        %688 = vmatpush1.msra.mxu0 0.0
        %689 = vmatprep.subr.mxu0 0.0
        %690 = vmatpush1.msra.mxu0 0.0
        %691 = vmatprep.subr.mxu0 0.0
        %692 = vmatpush1.msra.mxu0 0.0
        %693 = vmatprep.subr.mxu0 0.0
        %694 = vmatpush1.msra.mxu0 0.0
        %695 = vmatprep.subr.mxu0 0.0
        %696 = vmatpush1.msra.mxu0 0.0
        %697 = vmatprep.subr.mxu0 0.0
        %698 = vmatpush1.msra.mxu0 0.0
        %699 = vmatprep.subr.mxu0 0.0
        %700 = vmatpush1.msra.mxu0 0.0
        %701 = vmatprep.subr.mxu0 0.0
        %702 = vmatpush1.msra.mxu0 0.0
        %703 = vmatprep.subr.mxu0 0.0
        %704 = vmatpush1.msra.mxu0 0.0
        %705 = vmatprep.subr.mxu0 0.0
        %706 = vmatpush1.msra.mxu0 0.0
        %707 = vmatprep.subr.mxu0 0.0
        %708 = vmatpush1.msra.mxu0 0.0
        %709 = vmatprep.subr.mxu0 0.0
        %710 = vmatpush1.msra.mxu0 0.0
        %711 = vmatprep.subr.mxu0 0.0
        %712 = vmatpush1.msra.mxu0 0.0
        %713 = vmatprep.subr.mxu0 0.0
        %714 = vmatpush1.msra.mxu0 0.0
        %715 = vmatprep.subr.mxu0 0.0
        %716 = vmatpush1.msra.mxu0 0.0
        %717 = vmatprep.subr.mxu0 0.0
        %718 = vmatpush1.msra.mxu0 0.0
        %719 = vmatprep.subr.mxu0 0.0
        %720 = vmatpush1.msra.mxu0 0.0
        %721 = vmatprep.subr.mxu0 0.0
        %722 = vmatpush1.msra.mxu0 0.0
        %723 = vmatprep.subr.mxu0 0.0
        %724 = vmatpush1.msra.mxu0 0.0
        %725 = vmatprep.subr.mxu0 0.0
        %726 = vmatpush1.msra.mxu0 0.0
        %727 = vmatprep.mubr.f32.mxu0 0.0
        %728 = vmatmul.mubr.f32.gmra.mrb[0].mxu0 %v196
        %v729 = vpop.f32.mrb[0].mxu0
        %v730 = vadd.f32 0.0, %v729
        %v731 = vpop.f32.mrb[0].mxu0
        %732 = vmatprep.mubr.f32.mxu0 0.0
        %733 = vmatmul.mubr.f32.gmra.mrb[0].mxu0 %v199
        %v734 = vpop.f32.mrb[0].mxu0
        %v735 = vadd.f32 0.0, %v734
        %v736 = vpop.f32.mrb[0].mxu0
        %737 = vmatprep.mubr.f32.mxu0 0.0
        %738 = vmatmul.mubr.f32.gmra.mrb[0].mxu0 %v202
        %v739 = vpop.f32.mrb[0].mxu0
        %v740 = vadd.f32 0.0, %v739
        %v741 = vpop.f32.mrb[0].mxu0
        %742 = vmatprep.mubr.f32.mxu0 0.0
        %743 = vmatmul.mubr.f32.gmra.mrb[0].mxu0 %v205
        %v744 = vpop.f32.mrb[0].mxu0
        %v745 = vadd.f32 0.0, %v744
        %v746 = vpop.f32.mrb[0].mxu0
        %747 = vdwg.mxu0
        %v748 = vmax.f32 %v656, %v730
        %v749 = vmax.f32 %v657, %v735
        %v750 = vmax.f32 %v658, %v740
        %v751 = vmax.f32 %v659, %v745
        %s752 = scalar_lea.vmem %s165, 96 [#allocation2]
        %v753 = vld [vmem:[%s752] sm:$0xff]
        %v754 = vld [vmem:[%s752 + $0x8] sm:$0xff]
        %755 = vmatprep.subr.mxu0 0.0
        %756 = vmatpush1.msra.mxu0 %v753
        %757 = vmatprep.subr.mxu0 0.0
        %758 = vmatpush1.msra.mxu0 %v754
        %759 = vmatprep.subr.mxu0 0.0
        %760 = vmatpush1.msra.mxu0 0.0
        %761 = vmatprep.subr.mxu0 0.0
        %762 = vmatpush1.msra.mxu0 0.0
        %763 = vmatprep.subr.mxu0 0.0
        %764 = vmatpush1.msra.mxu0 0.0
        %765 = vmatprep.subr.mxu0 0.0
        %766 = vmatpush1.msra.mxu0 0.0
        %767 = vmatprep.subr.mxu0 0.0
        %768 = vmatpush1.msra.mxu0 0.0
        %769 = vmatprep.subr.mxu0 0.0
        %770 = vmatpush1.msra.mxu0 0.0
        %771 = vmatprep.subr.mxu0 0.0
        %772 = vmatpush1.msra.mxu0 0.0
        %773 = vmatprep.subr.mxu0 0.0
        %774 = vmatpush1.msra.mxu0 0.0
        %775 = vmatprep.subr.mxu0 0.0
        %776 = vmatpush1.msra.mxu0 0.0
        %777 = vmatprep.subr.mxu0 0.0
        %778 = vmatpush1.msra.mxu0 0.0
        %779 = vmatprep.subr.mxu0 0.0
        %780 = vmatpush1.msra.mxu0 0.0
        %781 = vmatprep.subr.mxu0 0.0
        %782 = vmatpush1.msra.mxu0 0.0
        %783 = vmatprep.subr.mxu0 0.0
        %784 = vmatpush1.msra.mxu0 0.0
        %785 = vmatprep.subr.mxu0 0.0
        %786 = vmatpush1.msra.mxu0 0.0
        %787 = vmatprep.subr.mxu0 0.0
        %788 = vmatpush1.msra.mxu0 0.0
        %789 = vmatprep.subr.mxu0 0.0
        %790 = vmatpush1.msra.mxu0 0.0
        %791 = vmatprep.subr.mxu0 0.0
        %792 = vmatpush1.msra.mxu0 0.0
        %793 = vmatprep.subr.mxu0 0.0
        %794 = vmatpush1.msra.mxu0 0.0
        %795 = vmatprep.subr.mxu0 0.0
        %796 = vmatpush1.msra.mxu0 0.0
        %797 = vmatprep.subr.mxu0 0.0
        %798 = vmatpush1.msra.mxu0 0.0
        %799 = vmatprep.subr.mxu0 0.0
        %800 = vmatpush1.msra.mxu0 0.0
        %801 = vmatprep.subr.mxu0 0.0
        %802 = vmatpush1.msra.mxu0 0.0
        %803 = vmatprep.subr.mxu0 0.0
        %804 = vmatpush1.msra.mxu0 0.0
        %805 = vmatprep.subr.mxu0 0.0
        %806 = vmatpush1.msra.mxu0 0.0
        %807 = vmatprep.subr.mxu0 0.0
        %808 = vmatpush1.msra.mxu0 0.0
        %809 = vmatprep.subr.mxu0 0.0
        %810 = vmatpush1.msra.mxu0 0.0
        %811 = vmatprep.subr.mxu0 0.0
        %812 = vmatpush1.msra.mxu0 0.0
        %813 = vmatprep.subr.mxu0 0.0
        %814 = vmatpush1.msra.mxu0 0.0
        %815 = vmatprep.subr.mxu0 0.0
        %816 = vmatpush1.msra.mxu0 0.0
        %817 = vmatprep.subr.mxu0 0.0
        %818 = vmatpush1.msra.mxu0 0.0
        %819 = vmatprep.mubr.f32.mxu0 0.0
        %820 = vmatmul.mubr.f32.gmra.mrb[0].mxu0 %v196
        %v821 = vpop.f32.mrb[0].mxu0
        %v822 = vadd.f32 0.0, %v821
        %v823 = vpop.f32.mrb[0].mxu0
        %824 = vmatprep.mubr.f32.mxu0 0.0
        %825 = vmatmul.mubr.f32.gmra.mrb[0].mxu0 %v199
        %v826 = vpop.f32.mrb[0].mxu0
        %v827 = vadd.f32 0.0, %v826
        %v828 = vpop.f32.mrb[0].mxu0
        %829 = vmatprep.mubr.f32.mxu0 0.0
        %830 = vmatmul.mubr.f32.gmra.mrb[0].mxu0 %v202
        %v831 = vpop.f32.mrb[0].mxu0
        %v832 = vadd.f32 0.0, %v831
        %v833 = vpop.f32.mrb[0].mxu0
        %834 = vmatprep.mubr.f32.mxu0 0.0
        %835 = vmatmul.mubr.f32.gmra.mrb[0].mxu0 %v205
        %v836 = vpop.f32.mrb[0].mxu0
        %v837 = vadd.f32 0.0, %v836
        %v838 = vpop.f32.mrb[0].mxu0
        %839 = vdwg.mxu0
        %v840 = vmax.f32 %v748, %v822
        %v841 = vmax.f32 %v749, %v827
        %v842 = vmax.f32 %v750, %v832
        %v843 = vmax.f32 %v751, %v837
        %s844 = scalar_lea.vmem %s165, 112 [#allocation2]
        %v845 = vld [vmem:[%s844] sm:$0xff]
        %v846 = vld [vmem:[%s844 + $0x8] sm:$0xff]
        %847 = vmatprep.subr.mxu0 0.0
        %848 = vmatpush1.msra.mxu0 %v845
        %849 = vmatprep.subr.mxu0 0.0
        %850 = vmatpush1.msra.mxu0 %v846
        %851 = vmatprep.subr.mxu0 0.0
        %852 = vmatpush1.msra.mxu0 0.0
        %853 = vmatprep.subr.mxu0 0.0
        %854 = vmatpush1.msra.mxu0 0.0
        %855 = vmatprep.subr.mxu0 0.0
        %856 = vmatpush1.msra.mxu0 0.0
        %857 = vmatprep.subr.mxu0 0.0
        %858 = vmatpush1.msra.mxu0 0.0
        %859 = vmatprep.subr.mxu0 0.0
        %860 = vmatpush1.msra.mxu0 0.0
        %861 = vmatprep.subr.mxu0 0.0
        %862 = vmatpush1.msra.mxu0 0.0
        %863 = vmatprep.subr.mxu0 0.0
        %864 = vmatpush1.msra.mxu0 0.0
        %865 = vmatprep.subr.mxu0 0.0
        %866 = vmatpush1.msra.mxu0 0.0
        %867 = vmatprep.subr.mxu0 0.0
        %868 = vmatpush1.msra.mxu0 0.0
        %869 = vmatprep.subr.mxu0 0.0
        %870 = vmatpush1.msra.mxu0 0.0
        %871 = vmatprep.subr.mxu0 0.0
        %872 = vmatpush1.msra.mxu0 0.0
        %873 = vmatprep.subr.mxu0 0.0
        %874 = vmatpush1.msra.mxu0 0.0
        %875 = vmatprep.subr.mxu0 0.0
        %876 = vmatpush1.msra.mxu0 0.0
        %877 = vmatprep.subr.mxu0 0.0
        %878 = vmatpush1.msra.mxu0 0.0
        %879 = vmatprep.subr.mxu0 0.0
        %880 = vmatpush1.msra.mxu0 0.0
        %881 = vmatprep.subr.mxu0 0.0
        %882 = vmatpush1.msra.mxu0 0.0
        %883 = vmatprep.subr.mxu0 0.0
        %884 = vmatpush1.msra.mxu0 0.0
        %885 = vmatprep.subr.mxu0 0.0
        %886 = vmatpush1.msra.mxu0 0.0
        %887 = vmatprep.subr.mxu0 0.0
        %888 = vmatpush1.msra.mxu0 0.0
        %889 = vmatprep.subr.mxu0 0.0
        %890 = vmatpush1.msra.mxu0 0.0
        %891 = vmatprep.subr.mxu0 0.0
        %892 = vmatpush1.msra.mxu0 0.0
        %893 = vmatprep.subr.mxu0 0.0
        %894 = vmatpush1.msra.mxu0 0.0
        %895 = vmatprep.subr.mxu0 0.0
        %896 = vmatpush1.msra.mxu0 0.0
        %897 = vmatprep.subr.mxu0 0.0
        %898 = vmatpush1.msra.mxu0 0.0
        %899 = vmatprep.subr.mxu0 0.0
        %900 = vmatpush1.msra.mxu0 0.0
        %901 = vmatprep.subr.mxu0 0.0
        %902 = vmatpush1.msra.mxu0 0.0
        %903 = vmatprep.subr.mxu0 0.0
        %904 = vmatpush1.msra.mxu0 0.0
        %905 = vmatprep.subr.mxu0 0.0
        %906 = vmatpush1.msra.mxu0 0.0
        %907 = vmatprep.subr.mxu0 0.0
        %908 = vmatpush1.msra.mxu0 0.0
        %909 = vmatprep.subr.mxu0 0.0
        %910 = vmatpush1.msra.mxu0 0.0
        %911 = vmatprep.mubr.f32.mxu0 0.0
        %912 = vmatmul.mubr.f32.gmra.mrb[0].mxu0 %v196
        %v913 = vpop.f32.mrb[0].mxu0
        %v914 = vadd.f32 0.0, %v913
        %v915 = vpop.f32.mrb[0].mxu0
        %916 = vmatprep.mubr.f32.mxu0 0.0
        %917 = vmatmul.mubr.f32.gmra.mrb[0].mxu0 %v199
        %v918 = vpop.f32.mrb[0].mxu0
        %v919 = vadd.f32 0.0, %v918
        %v920 = vpop.f32.mrb[0].mxu0
        %921 = vmatprep.mubr.f32.mxu0 0.0
        %922 = vmatmul.mubr.f32.gmra.mrb[0].mxu0 %v202
        %v923 = vpop.f32.mrb[0].mxu0
        %v924 = vadd.f32 0.0, %v923
        %v925 = vpop.f32.mrb[0].mxu0
        %926 = vmatprep.mubr.f32.mxu0 0.0
        %927 = vmatmul.mubr.f32.gmra.mrb[0].mxu0 %v205
        %v928 = vpop.f32.mrb[0].mxu0
        %v929 = vadd.f32 0.0, %v928
        %v930 = vpop.f32.mrb[0].mxu0
        %931 = vdwg.mxu0
        %v932 = vmax.f32 %v840, %v914
        %v933 = vmax.f32 %v841, %v919
        %v934 = vmax.f32 %v842, %v924
        %v935 = vmax.f32 %v843, %v929
        %v936 = vld [vmem:[%s2] sm:$0xff]
        %v937 = vld [vmem:[%s2 + $0x8] sm:$0xff]
        %v938 = vld [vmem:[%s2 + $0x10] sm:$0xff]
        %v939 = vld [vmem:[%s2 + $0x18] sm:$0xff]
        %941 = vset.pattern.permute.xlu0 0
        %942 = vperm.xlu0 %941, %v936
        %v943 = vpop.permute.xlu0 %942
        %946 = vset.pattern.permute.xlu0 0
        %947 = vperm.xlu0 %946, %v937
        %v948 = vpop.permute.xlu0 %947
        %951 = vset.pattern.permute.xlu0 0
        %952 = vperm.xlu0 %951, %v938
        %v953 = vpop.permute.xlu0 %952
        %956 = vset.pattern.permute.xlu0 0
        %957 = vperm.xlu0 %956, %v939
        %v958 = vpop.permute.xlu0 %957
        %v960 = vadd.f32 %v932, %v943
        %v961 = vadd.f32 %v933, %v948
        %v962 = vadd.f32 %v934, %v953
        %v963 = vadd.f32 %v935, %v958
        %v964 = vmax.f32 %v960, 0.0
        %v965 = vmax.f32 %v961, 0.0
        %v966 = vmax.f32 %v962, 0.0
        %v967 = vmax.f32 %v963, 0.0
        %968 = vst [vmem:[%s187] sm:$0xff] %v964
        %969 = vst [vmem:[%s187 + $0x8] sm:$0xff] %v965
        %970 = vst [vmem:[%s187 + $0x10] sm:$0xff] %v966
        %971 = vst [vmem:[%s187 + $0x18] sm:$0xff] %v967
        %s972 = sand.u32 %s96, 1
        %s973 = scalar_lea.sflag [#allocation4], %s972
        %s974 = sand.u32 %s96, 1
        %s975 = smul.addr %s974, 32
        %s976 = scalar_lea.vmem [#allocation5], %s975
        // Predicated region
        $region37: #{tpu_custom_call.1} parent=31 // pred_check
          %p977 = pneg %p106
        $region38: #{tpu_custom_call.1} parent=31 // pred_check_branch
          %979 = sbr.rel (%p977) target = $region40
        $region39: #{tpu_custom_call.1} parent=31 // pred_region
          %s981 = ssub.s32 512, 512
          %982 = vsyncadd %s973, %s981
          %s983 = smul.addr %s20, 128
          %s984 = scalar_lea.hbm %s3, %s983
          %s985 = sshll.u32 %s976, 4
          %s986 = int_to_ptr.vmem [resolvable:$true] %s985
          %991 = dma.vmem_to_hbm [thread:$0]  %s986, 512, %s984, %s973, 128, 256, 8
        $region40: #{tpu_custom_call.1} parent=31 // pred_fallthru
          _
      $region32: #{tpu_custom_call.1} parent=5 // pred_fallthru
        _
      %p992 = scmp.le.s32.totalorder 2, %s15
      // Predicated region
      $region41: #{tpu_custom_call.1} parent=5 // pred_check
        %p993 = pneg %p992
      $region42: #{tpu_custom_call.1} parent=5 // pred_check_branch
        %995 = sbr.rel (%p993) target = $region44
      $region43: #{tpu_custom_call.1} parent=5 // pred_region
        %s996 = ssub.s32 %s15, 2
        // Predicated region
        $region45: #{tpu_custom_call.1} parent=43 // pred_check
          %p997 = pneg %p112
        $region46: #{tpu_custom_call.1} parent=43 // pred_check_branch
          %999 = sbr.rel (%p997) target = $region48
        $region47: #{tpu_custom_call.1} parent=43 // pred_region
          %s1000 = sand.u32 %s97, 1
          %s1001 = scalar_lea.sflag [#allocation4], %s1000
          %s1002 = sand.u32 %s97, 1
          %s1003 = smul.addr %s1002, 32
          %s1004 = scalar_lea.vmem [#allocation5], %s1003
          %1005 = dma.done %s1001, 512
        $region48: #{tpu_custom_call.1} parent=43 // pred_fallthru
          _
      $region44: #{tpu_custom_call.1} parent=5 // pred_fallthru
        _
    $region6: #{tpu_custom_call.1} parent=1 // loop_footer
      %s19 = sadd.s32 1, %s15
    $region7: #{tpu_custom_call.1} parent=1 // loop_footer_branch
      %14 = sbr.rel target = $region3
    $region8: #{tpu_custom_call.1} parent=1 // loop_exit
      _
    %1006 = vsyncpa [#allocation3], 1
    %s1007 = scalar_lea.sflag [#allocation3], 1
    %1008 = vsyncpa %s1007, 1
    %1009 = vsyncpa [#allocation4], 1
    %s1010 = scalar_lea.sflag [#allocation4], 1
    %1011 = vsyncpa %s1010, 1

</llo_original>
